<compile_context>
chip_gen: v5e
topology: v5e:2x2
jax: 0.10.0
libtpu: 0.0.40
codegen_flags: <defaults>
</compile_context>

<pallas_src>
import functools

import jax
import jax.numpy as jnp
from jax import lax
from jax.experimental import pallas as pl
from jax.experimental.pallas import tpu as pltpu


# ----------------------------------------------------------------------------
# Kernel: normalized Gram matrix  G = (X @ X^T) / norm
#   Grid iterates over the H*W (contraction) axis; G (the output block) is the
#   accumulator -- its block index is constant across the reduction axis.
# ----------------------------------------------------------------------------
def _gram_kernel(x_ref, g_ref, *, inv_norm):
    k = pl.program_id(0)

    @pl.when(k == 0)
    def _():
        g_ref[...] = jnp.zeros_like(g_ref)

    xk = x_ref[...]  # (nc, tk) f32
    # X_k @ X_k^T without materializing a transpose: contract the lane axis
    # (dim 1) of both operands so the MXU reads both tiles in natural layout.
    g_ref[...] += lax.dot_general(
        xk, xk,
        dimension_numbers=(((1,), (1,)), ((), ())),
        preferred_element_type=jnp.float32,
    )

    @pl.when(k == pl.num_programs(0) - 1)
    def _():
        g_ref[...] = g_ref[...] * inv_norm


def _choose_tk(nc, hw, *, input_budget_bytes=32 * 1024 * 1024, tk_cap=4096):
    """Largest lane-aligned contraction tile that fits the VMEM input budget."""
    hw128 = ((hw + 127) // 128) * 128
    # double-buffered f32 input slab: 2 * nc * tk * 4 bytes
    max_tk = input_budget_bytes // (2 * nc * 4)
    max_tk = max(128, (max_tk // 128) * 128)
    return min(hw128, tk_cap, max_tk)


def gram_pallas(x_2d, norm):
    """x_2d: (NC, HW) f32 -> normalized gram (NC, NC) f32."""
    nc, hw = x_2d.shape
    tk = _choose_tk(nc, hw)
    hw_pad = ((hw + tk - 1) // tk) * tk
    if hw_pad != hw:
        # Zero-padding the contraction axis is exact for X @ X^T.
        x_2d = jnp.pad(x_2d, ((0, 0), (0, hw_pad - hw)))

    kernel = functools.partial(_gram_kernel, inv_norm=1.0 / float(norm))

    # input double-buffer + resident output + slack; cap for v7x's 64 MiB VMEM.
    vmem_bytes = 2 * nc * tk * 4 + 2 * nc * nc * 4 + (4 << 20)
    vmem_limit = int(min(max(vmem_bytes, 16 << 20), 48 << 20))

    return pl.pallas_call(
        kernel,
        out_shape=jax.ShapeDtypeStruct((nc, nc), jnp.float32),
        grid_spec=pltpu.PrefetchScalarGridSpec(
            num_scalar_prefetch=0,
            grid=(hw_pad // tk,),
            in_specs=[pl.BlockSpec((nc, tk), lambda k: (0, k))],
            out_specs=pl.BlockSpec((nc, nc), lambda k: (0, 0)),
        ),
        compiler_params=pltpu.CompilerParams(
            dimension_semantics=("arbitrary",),
            vmem_limit_bytes=vmem_limit,
        ),
    )(x_2d)


# ----------------------------------------------------------------------------
# StyleLoss module equivalent.
# ----------------------------------------------------------------------------
class StyleLossPallas:
    def __init__(self, target_feature):
        n, c, h, w = target_feature.shape
        tgt_2d = jnp.asarray(target_feature, jnp.float32).reshape(n * c, h * w)
        # target gram computed once at init with the Pallas gram kernel
        self.target = gram_pallas(tgt_2d, n * c * h * w)
        self.loss = None

    def __call__(self, x):
        # x: NCHW, same shape as target_feature
        n, c, h, w = x.shape
        x_2d = jnp.asarray(x, jnp.float32).reshape(n * c, h * w)
        g = gram_pallas(x_2d, n * c * h * w)
        # The (nc, nc) MSE against the constant target is negligible work;
        # doing it in plain JAX avoids double-buffering the constant target
        # and a masked (1,1) scalar VMEM store inside the kernel.
        self.loss = jnp.mean((g - self.target) ** 2)
        return x  # module returns its input unchanged (pass-through layer)


# ----------------------------------------------------------------------------
# Pure-JAX reference for verification.
# ----------------------------------------------------------------------------
def _gram_ref(x):
    n, c, h, w = x.shape
    x2 = x.reshape(n * c, h * w)
    return (x2 @ x2.T) / (n * c * h * w)


if __name__ == "__main__":
    key = jax.random.PRNGKey(0)
    k_tgt, k_in, k_tgt2, k_in2 = jax.random.split(key, 4)

    # --- main check: (2, 4, 16, 16), H*W = 256 (lane-aligned) ---------------
    N, C, H, W = 2, 4, 16, 16
    target_feature = jax.random.normal(k_tgt, (N, C, H, W), dtype=jnp.float32)
    x = jax.random.normal(k_in, (N, C, H, W), dtype=jnp.float32)

    module = StyleLossPallas(target_feature)
    out = jax.block_until_ready(module(x))
    loss = jax.block_until_ready(module.loss)

    g_ref = _gram_ref(x)
    t_ref = _gram_ref(target_feature)
    loss_ref = jnp.mean((g_ref - t_ref) ** 2)

    assert out.shape == x.shape and jnp.allclose(out, x)
    assert jnp.allclose(module.target, t_ref, rtol=1e-5, atol=1e-6)
    assert jnp.allclose(loss, loss_ref, rtol=1e-5, atol=1e-6), (loss, loss_ref)

    # --- secondary check: H*W = 196 (exercises the zero-padding path) ------
    N2, C2, H2, W2 = 2, 4, 14, 14
    tgt2 = jax.random.normal(k_tgt2, (N2, C2, H2, W2), dtype=jnp.float32)
    x2 = jax.random.normal(k_in2, (N2, C2, H2, W2), dtype=jnp.float32)
    mod2 = StyleLossPallas(tgt2)
    out2 = jax.block_until_ready(mod2(x2))
    loss2 = jax.block_until_ready(mod2.loss)
    loss2_ref = jnp.mean((_gram_ref(x2) - _gram_ref(tgt2)) ** 2)
    assert jnp.allclose(out2, x2)
    assert jnp.allclose(loss2, loss2_ref, rtol=1e-5, atol=1e-6), (loss2, loss2_ref)

    print("KERNEL_OK")
</pallas_src>

<mosaic_0001>
module attributes {stable_mosaic.version = 11 : i64} {
  func.func @_gram_kernel(%arg0: i32, %arg1: memref<8x256xf32, #tpu.memory_space<vmem>>, %arg2: memref<8x8xf32, #tpu.memory_space<vmem>>) attributes {dimension_semantics = [#tpu.dimension_semantics<arbitrary>], iteration_bounds = array<i64: 1>, scalar_prefetch = 0 : i64, scratch_operands = 0 : i64, tpu.core_type = #tpu.core_type<tc>, window_params = [{transform_indices = @transform_0, window_bounds = array<i64: 8, 256>}, {pipeline_mode = #tpu.pipeline_mode<synchronous>, transform_indices = @transform_1, window_bounds = array<i64: 8, 8>}]} {
    %c0_i32 = arith.constant 0 : i32
    %0 = arith.cmpi eq, %arg0, %c0_i32 : i32
    %1 = arith.extui %0 : i1 to i32
    %c0_i32_0 = arith.constant 0 : i32
    %2 = arith.cmpi ne, %1, %c0_i32_0 : i32
    scf.if %2 {
      %cst_8 = arith.constant 0.000000e+00 : f32
      %11 = vector.broadcast %cst_8 : f32 to vector<8x8xf32>
      %c0_9 = arith.constant 0 : index
      %c0_10 = arith.constant 0 : index
      %12 = vector.load %arg2[%c0_9, %c0_10] : memref<8x8xf32, #tpu.memory_space<vmem>>, vector<8x8xf32>
      tpu.vector_store %arg2[%c0_9, %c0_10], %11 {strides = array<i32>} : memref<8x8xf32, #tpu.memory_space<vmem>>, vector<8x8xf32>,
    } else {
    }
    %c0 = arith.constant 0 : index
    %c0_1 = arith.constant 0 : index
    %3 = vector.load %arg1[%c0, %c0_1] : memref<8x256xf32, #tpu.memory_space<vmem>>, vector<8x256xf32>
    %c0_2 = arith.constant 0 : index
    %c0_3 = arith.constant 0 : index
    %4 = vector.load %arg2[%c0_2, %c0_3] : memref<8x8xf32, #tpu.memory_space<vmem>>, vector<8x8xf32>
    %cst = arith.constant dense<0.000000e+00> : vector<8x8xf32>
    %5 = tpu.matmul %3, %3, %cst {dimension_numbers = #tpu.dot_dimension_numbers<[1], [1], [0], [0], [0, 0, 1, 0], [], []>} : vector<8x256xf32>, vector<8x256xf32>, vector<8x8xf32> -> vector<8x8xf32>
    %6 = arith.addf %4, %5 : vector<8x8xf32>
    %c0_4 = arith.constant 0 : index
    %c0_5 = arith.constant 0 : index
    %7 = vector.load %arg2[%c0_4, %c0_5] : memref<8x8xf32, #tpu.memory_space<vmem>>, vector<8x8xf32>
    tpu.vector_store %arg2[%c0_4, %c0_5], %6 {strides = array<i32>} : memref<8x8xf32, #tpu.memory_space<vmem>>, vector<8x8xf32>,
    %c0_i32_6 = arith.constant 0 : i32
    %8 = arith.cmpi eq, %arg0, %c0_i32_6 : i32
    %9 = arith.extui %8 : i1 to i32
    %c0_i32_7 = arith.constant 0 : i32
    %10 = arith.cmpi ne, %9, %c0_i32_7 : i32
    scf.if %10 {
      %c0_8 = arith.constant 0 : index
      %c0_9 = arith.constant 0 : index
      %11 = vector.load %arg2[%c0_8, %c0_9] : memref<8x8xf32, #tpu.memory_space<vmem>>, vector<8x8xf32>
      %cst_10 = arith.constant 4.8828125E-4 : f32
      %12 = vector.broadcast %cst_10 : f32 to vector<8x8xf32>
      %13 = arith.mulf %11, %12 : vector<8x8xf32>
      %c0_11 = arith.constant 0 : index
      %c0_12 = arith.constant 0 : index
      %14 = vector.load %arg2[%c0_11, %c0_12] : memref<8x8xf32, #tpu.memory_space<vmem>>, vector<8x8xf32>
      tpu.vector_store %arg2[%c0_11, %c0_12], %13 {strides = array<i32>} : memref<8x8xf32, #tpu.memory_space<vmem>>, vector<8x8xf32>,
    } else {
    }
    return
  }
  func.func @transform_0(%arg0: i32) -> (i32, i32) {
    %c0_i32 = arith.constant 0 : i32
    %c0_i32_0 = arith.constant 0 : i32
    return %c0_i32, %arg0 : i32, i32
  }
  func.func @transform_1(%arg0: i32) -> (i32, i32) {
    %c0_i32 = arith.constant 0 : i32
    %c0_i32_0 = arith.constant 0 : i32
    %c0_i32_1 = arith.constant 0 : i32
    return %c0_i32, %c0_i32_0 : i32, i32
  }
}

</mosaic_0001>

<llo_original>
// kernel: tpu_custom_call.1
$region0: #{tpu_custom_call.1}
  #allocation0 [shape = 'u32[]', space=smem, size = 0x4, offset = 0x4, fixed_abs, tag = 'smem constant byte address 0x4 - core index']
  #allocation1 [shape = 'u32[72,128]{1,0:T(1,128)}', space=vmem, size = 0x9000, scoped, tag = 'internal scratch']
  %s0 = inlined_call_operand.hbm [shape: f32[8,256], index: 0, kind: input, shape index: {}]
  %s1 = inlined_call_operand.hbm [shape: f32[8,8], index: 1, kind: output, shape index: {}]
  %s2 = sld [smem:[#allocation0]]
  $region26: #{tpu_custom_call.1} parent=0
    _
  %s4 = ssub.s32 1, %s2
  %s5 = scalar_select 0, %s4, %s2
  $region1: #{tpu_custom_call.1} parent=0
    #allocation2 [shape = 'u8[8192]{0}', space=vmem, size = 0x2000, scoped, tag = 'input window, operand 0, single buffered']
    #allocation3 [shape = 's32[1]{0}', space=sflag, size = 0x4, scoped, tag = 'scoped memory for tpu_custom_call.1']
    #allocation4 [shape = 's32[1]{0}', space=sflag, size = 0x4, scoped, tag = 'scoped memory for tpu_custom_call.1']
    #allocation5 [shape = 'u8[4096]{0}', space=vmem, size = 0x1000, scoped, tag = 'output window, operand 0, single buffered']
    %6 = vsyncpa [#allocation3], 0
    %7 = vsyncpa [#allocation4], 0
    // Predicated region
    $region2: #{tpu_custom_call.1} parent=1 // pred_check
      _
    $region3: #{tpu_custom_call.1} parent=1 // pred_check_branch
      %9 = sbr.rel (0) target = $region5
    $region4: #{tpu_custom_call.1} parent=1 // pred_region
      %11 = vsyncadd [#allocation3], 0
      %s13 = sshll.u32 %s0, 4
      %s14 = int_to_ptr.hbm [resolvable:$true] %s13
      %s15 = sshll.u32 [#allocation2], 4
      %s16 = int_to_ptr.vmem [resolvable:$true] %s15
      %18 = dma.hbm_to_vmem [thread:$0]  %s14, 256, %s16, [#allocation3]
    $region5: #{tpu_custom_call.1} parent=1 // pred_fallthru
      _
    // Predicated region
    $region6: #{tpu_custom_call.1} parent=1 // pred_check
      _
    $region7: #{tpu_custom_call.1} parent=1 // pred_check_branch
      %20 = sbr.rel (0) target = $region9
    $region8: #{tpu_custom_call.1} parent=1 // pred_region
      %22 = dma.done [#allocation3], 256
    $region9: #{tpu_custom_call.1} parent=1 // pred_fallthru
      _
    %p23 = scmp.eq.s32.totalorder 0, 0
    // Predicated region
    $region10: #{tpu_custom_call.1} parent=1 // pred_check
      %p24 = pneg %p23
    $region11: #{tpu_custom_call.1} parent=1 // pred_check_branch
      %26 = sbr.rel (%p24) target = $region13
    $region12: #{tpu_custom_call.1} parent=1 // pred_region
      %vm27 = vcmask 64512
      %28 = vst.msk [vmem:[#allocation5] sm:$0xff] %vm27, 0.0
    $region13: #{tpu_custom_call.1} parent=1 // pred_fallthru
      _
    %v29 = vld [vmem:[#allocation2] sm:$0xff]
    %v30 = vld [vmem:[#allocation2 + $0x8] sm:$0xff]
    %v31 = vld [vmem:[#allocation5] sm:$0xff]
    %32 = vmatpush.xpose.msra.mxu0 0.0
    %33 = vmatpush.xpose.msra.mxu0 0.0
    %34 = vmatpush.xpose.msra.mxu0 0.0
    %35 = vmatpush.xpose.msra.mxu0 0.0
    %36 = vmatpush.xpose.msra.mxu0 0.0
    %37 = vmatpush.xpose.msra.mxu0 0.0
    %38 = vmatpush.xpose.msra.mxu0 0.0
    %39 = vmatpush.xpose.msra.mxu0 0.0
    %40 = vmatpush.xpose.msra.mxu0 0.0
    %41 = vmatpush.xpose.msra.mxu0 0.0
    %42 = vmatpush.xpose.msra.mxu0 0.0
    %43 = vmatpush.xpose.msra.mxu0 0.0
    %44 = vmatpush.xpose.msra.mxu0 0.0
    %45 = vmatpush.xpose.msra.mxu0 0.0
    %46 = vmatpush.xpose.msra.mxu0 0.0
    %47 = vmatpush.xpose.msra.mxu0 %v29
    %48 = vmatmul.f32.gmra.mxu0 %v29
    %v49 = vpop.f32.mrf.mxu0
    %v50 = vadd.f32 0.0, %v49
    %51 = vdwg.mxu0
    %52 = vmatpush.xpose.msra.mxu0 0.0
    %53 = vmatpush.xpose.msra.mxu0 0.0
    %54 = vmatpush.xpose.msra.mxu0 0.0
    %55 = vmatpush.xpose.msra.mxu0 0.0
    %56 = vmatpush.xpose.msra.mxu0 0.0
    %57 = vmatpush.xpose.msra.mxu0 0.0
    %58 = vmatpush.xpose.msra.mxu0 0.0
    %59 = vmatpush.xpose.msra.mxu0 0.0
    %60 = vmatpush.xpose.msra.mxu0 0.0
    %61 = vmatpush.xpose.msra.mxu0 0.0
    %62 = vmatpush.xpose.msra.mxu0 0.0
    %63 = vmatpush.xpose.msra.mxu0 0.0
    %64 = vmatpush.xpose.msra.mxu0 0.0
    %65 = vmatpush.xpose.msra.mxu0 0.0
    %66 = vmatpush.xpose.msra.mxu0 0.0
    %67 = vmatpush.xpose.msra.mxu0 %v30
    %68 = vmatmul.f32.gmra.mxu0 %v30
    %v69 = vpop.f32.mrf.mxu0
    %v70 = vadd.f32 %v50, %v69
    %71 = vdwg.mxu0
    %v72 = vadd.f32 %v31, %v70
    %vm73 = vcmask 64512
    %74 = vst.msk [vmem:[#allocation5] sm:$0xff] %vm73, %v72
    // Predicated region
    $region14: #{tpu_custom_call.1} parent=1 // pred_check
      %p75 = pneg %p23
    $region15: #{tpu_custom_call.1} parent=1 // pred_check_branch
      %77 = sbr.rel (%p75) target = $region17
    $region16: #{tpu_custom_call.1} parent=1 // pred_region
      %v78 = vld [vmem:[#allocation5] sm:$0xff]
      %v79 = vmul.f32 %v78, 0.00048828125
      %80 = vst.msk [vmem:[#allocation5] sm:$0xff] %vm73, %v79
    $region17: #{tpu_custom_call.1} parent=1 // pred_fallthru
      _
    // Predicated region
    $region18: #{tpu_custom_call.1} parent=1 // pred_check
      _
    $region19: #{tpu_custom_call.1} parent=1 // pred_check_branch
      %82 = sbr.rel (0) target = $region21
    $region20: #{tpu_custom_call.1} parent=1 // pred_region
      %84 = vsyncadd [#allocation4], 0
      %s86 = sshll.u32 [#allocation5], 4
      %s87 = int_to_ptr.vmem [resolvable:$true] %s86
      %s88 = sshll.u32 %s1, 4
      %s89 = int_to_ptr.hbm [resolvable:$true] %s88
      %91 = dma.vmem_to_hbm [thread:$0]  %s87, 128, %s89, [#allocation4]
    $region21: #{tpu_custom_call.1} parent=1 // pred_fallthru
      _
    // Predicated region
    $region22: #{tpu_custom_call.1} parent=1 // pred_check
      _
    $region23: #{tpu_custom_call.1} parent=1 // pred_check_branch
      %93 = sbr.rel (0) target = $region25
    $region24: #{tpu_custom_call.1} parent=1 // pred_region
      %95 = dma.done [#allocation4], 128
    $region25: #{tpu_custom_call.1} parent=1 // pred_fallthru
      _
    %96 = vsyncpa [#allocation3], 1
    %97 = vsyncpa [#allocation4], 1

</llo_original>
